<compile_context>
chip_gen: v6e
topology: v6e:2x2x1
jax: 0.10.0
libtpu: 0.0.40
codegen_flags: <defaults>
</compile_context>

<pallas_src>
import functools

import jax
import jax.numpy as jnp
from jax.experimental import pallas as pl
from jax.experimental.pallas import tpu as pltpu


def _fused_mlp_kernel(*refs, num_layers: int):
    """refs = (x_ref, w0, b0, w1, b1, ..., w_{L-1}, b_{L-1}, o_ref)."""
    x_ref = refs[0]
    o_ref = refs[-1]
    wb = refs[1:-1]

    # Chain all layers in f32; intermediates never leave vregs/VMEM.
    h = x_ref[...].astype(jnp.float32)
    for i in range(num_layers):
        w = wb[2 * i][...]
        b = wb[2 * i + 1][...]
        h = jnp.dot(h, w, preferred_element_type=jnp.float32) + b  # bias on f32 accumulator
        if i < num_layers - 1:
            h = jnp.maximum(h, 0.0)  # ReLU on every layer except the last
    o_ref[...] = h.astype(o_ref.dtype)


def _round_up(n: int, m: int) -> int:
    return ((n + m - 1) // m) * m


def mlp_decoder_forward(params, x, *, batch_tile: int = 512, lane_pad_output: bool = True):
    """Fused MLP decoder forward. x: (batch, emb_dim) -> (batch, out_size)."""
    batch, emb_dim = x.shape
    num_layers = len(params)
    out_size = params[-1][0].shape[1]

    # Lane-dense final store: pad the last layer's output dim to a multiple of 128
    # (zero columns), write an unmasked full-lane slab, slice in the wrapper.
    params = list(params)
    padded_out = out_size
    if lane_pad_output and out_size % 128 != 0:
        padded_out = _round_up(out_size, 128)
        w_last, b_last = params[-1]
        w_last = jnp.pad(w_last, ((0, 0), (0, padded_out - out_size)))
        b_last = jnp.pad(b_last, ((0, 0), (0, padded_out - out_size)))
        params[-1] = (w_last, b_last)

    # Batch tiling: full batch if small; otherwise tile so x/out DMA pipelines with
    # compute and the grid axis can be sharded across v7x's two TensorCores.
    tile_b = batch if batch <= batch_tile else batch_tile
    grid = (pl.cdiv(batch, tile_b),)

    in_specs = [pl.BlockSpec((tile_b, emb_dim), lambda i: (i, 0))]
    flat_wb = []
    for w, b in params:
        # Weights/biases: full-array blocks pinned to (0, 0) -> stay VMEM-resident
        # across all batch-grid iterations (total footprint is tiny).
        in_specs.append(pl.BlockSpec(w.shape, lambda i: (0, 0)))
        in_specs.append(pl.BlockSpec(b.shape, lambda i: (0, 0)))
        flat_wb.extend((w, b))

    kernel = functools.partial(_fused_mlp_kernel, num_layers=num_layers)
    out = pl.pallas_call(
        kernel,
        out_shape=jax.ShapeDtypeStruct((batch, padded_out), x.dtype),
        grid=grid,
        in_specs=in_specs,
        out_specs=pl.BlockSpec((tile_b, padded_out), lambda i: (i, 0)),
        compiler_params=pltpu.CompilerParams(
            dimension_semantics=("parallel",),  # megacore sharding on v7x
        ),
    )(x, *flat_wb)

    if padded_out != out_size:
        out = out[:, :out_size]
    return out


def init_mlp_decoder_params(key, emb_dim, decoder_hidden, out_size, dtype=jnp.float32):
    """Deterministic init mirroring nn.Linear default (U(-1/sqrt(fan_in), 1/sqrt(fan_in)))."""
    dims = [emb_dim] + list(decoder_hidden) + [out_size]
    params = []
    for i in range(len(dims) - 1):
        fan_in, fan_out = dims[i], dims[i + 1]
        key, kw, kb = jax.random.split(key, 3)
        bound = 1.0 / jnp.sqrt(jnp.asarray(fan_in, dtype))
        w = jax.random.uniform(kw, (fan_in, fan_out), dtype, -bound, bound)
        b = jax.random.uniform(kb, (1, fan_out), dtype, -bound, bound)
        params.append((w, b))
    return params


if __name__ == "__main__":
    batch = 8
    emb_dim = 32
    decoder_hidden = [32, 32, 32]
    out_size = 16

    key = jax.random.PRNGKey(0)
    key, kx = jax.random.split(key)
    x = jax.random.normal(kx, (batch, emb_dim), jnp.float32)

    params = init_mlp_decoder_params(key, emb_dim, decoder_hidden, out_size)

    out = mlp_decoder_forward(params, x)
    out = jax.block_until_ready(out)

    # reference check in plain JAX (ReLU after all layers except the last)
    ref = x
    for i, (w, b) in enumerate(params):
        ref = ref @ w + b
        if i < len(params) - 1:
            ref = jnp.maximum(ref, 0.0)
    assert out.shape == (batch, out_size)
    assert jnp.allclose(out, ref, atol=1e-5, rtol=1e-5)

    print("KERNEL_OK")
</pallas_src>

<mosaic_0001>
module attributes {stable_mosaic.version = 11 : i64} {
  func.func @_fused_mlp_kernel(%arg0: i32, %arg1: memref<8x32xf32, #tpu.memory_space<vmem>>, %arg2: memref<32x32xf32, #tpu.memory_space<vmem>>, %arg3: memref<1x32xf32, #tpu.memory_space<vmem>>, %arg4: memref<32x32xf32, #tpu.memory_space<vmem>>, %arg5: memref<1x32xf32, #tpu.memory_space<vmem>>, %arg6: memref<32x32xf32, #tpu.memory_space<vmem>>, %arg7: memref<1x32xf32, #tpu.memory_space<vmem>>, %arg8: memref<32x128xf32, #tpu.memory_space<vmem>>, %arg9: memref<1x128xf32, #tpu.memory_space<vmem>>, %arg10: memref<8x128xf32, #tpu.memory_space<vmem>>) attributes {dimension_semantics = [#tpu.dimension_semantics<parallel>], iteration_bounds = array<i64: 1>, scalar_prefetch = 0 : i64, scratch_operands = 0 : i64, tpu.core_type = #tpu.core_type<tc>, window_params = [{transform_indices = @transform_0, window_bounds = array<i64: 8, 32>}, {pipeline_mode = #tpu.pipeline_mode<synchronous>, transform_indices = @transform_1, window_bounds = array<i64: 32, 32>}, {pipeline_mode = #tpu.pipeline_mode<synchronous>, transform_indices = @transform_2, window_bounds = array<i64: 1, 32>}, {pipeline_mode = #tpu.pipeline_mode<synchronous>, transform_indices = @transform_3, window_bounds = array<i64: 32, 32>}, {pipeline_mode = #tpu.pipeline_mode<synchronous>, transform_indices = @transform_4, window_bounds = array<i64: 1, 32>}, {pipeline_mode = #tpu.pipeline_mode<synchronous>, transform_indices = @transform_5, window_bounds = array<i64: 32, 32>}, {pipeline_mode = #tpu.pipeline_mode<synchronous>, transform_indices = @transform_6, window_bounds = array<i64: 1, 32>}, {pipeline_mode = #tpu.pipeline_mode<synchronous>, transform_indices = @transform_7, window_bounds = array<i64: 32, 128>}, {pipeline_mode = #tpu.pipeline_mode<synchronous>, transform_indices = @transform_8, window_bounds = array<i64: 1, 128>}, {transform_indices = @transform_9, window_bounds = array<i64: 8, 128>}]} {
    %c0 = arith.constant 0 : index
    %c0_0 = arith.constant 0 : index
    %0 = vector.load %arg1[%c0, %c0_0] : memref<8x32xf32, #tpu.memory_space<vmem>>, vector<8x32xf32>
    %c0_1 = arith.constant 0 : index
    %c0_2 = arith.constant 0 : index
    %1 = vector.load %arg2[%c0_1, %c0_2] : memref<32x32xf32, #tpu.memory_space<vmem>>, vector<32x32xf32>
    %c0_3 = arith.constant 0 : index
    %c0_4 = arith.constant 0 : index
    %2 = vector.load %arg3[%c0_3, %c0_4] : memref<1x32xf32, #tpu.memory_space<vmem>>, vector<1x32xf32>
    %cst = arith.constant dense<0.000000e+00> : vector<8x32xf32>
    %3 = tpu.matmul %0, %1, %cst {dimension_numbers = #tpu.dot_dimension_numbers<[1], [0], [0], [1], [0, 0, 1, 1], [], []>} : vector<8x32xf32>, vector<32x32xf32>, vector<8x32xf32> -> vector<8x32xf32>
    %4 = vector.broadcast %2 : vector<1x32xf32> to vector<8x32xf32>
    %5 = arith.addf %3, %4 : vector<8x32xf32>
    %cst_5 = arith.constant 0.000000e+00 : f32
    %6 = vector.broadcast %cst_5 : f32 to vector<8x32xf32>
    %7 = arith.maximumf %5, %6 : vector<8x32xf32>
    %c0_6 = arith.constant 0 : index
    %c0_7 = arith.constant 0 : index
    %8 = vector.load %arg4[%c0_6, %c0_7] : memref<32x32xf32, #tpu.memory_space<vmem>>, vector<32x32xf32>
    %c0_8 = arith.constant 0 : index
    %c0_9 = arith.constant 0 : index
    %9 = vector.load %arg5[%c0_8, %c0_9] : memref<1x32xf32, #tpu.memory_space<vmem>>, vector<1x32xf32>
    %cst_10 = arith.constant dense<0.000000e+00> : vector<8x32xf32>
    %10 = tpu.matmul %7, %8, %cst_10 {dimension_numbers = #tpu.dot_dimension_numbers<[1], [0], [0], [1], [0, 0, 1, 1], [], []>} : vector<8x32xf32>, vector<32x32xf32>, vector<8x32xf32> -> vector<8x32xf32>
    %11 = vector.broadcast %9 : vector<1x32xf32> to vector<8x32xf32>
    %12 = arith.addf %10, %11 : vector<8x32xf32>
    %cst_11 = arith.constant 0.000000e+00 : f32
    %13 = vector.broadcast %cst_11 : f32 to vector<8x32xf32>
    %14 = arith.maximumf %12, %13 : vector<8x32xf32>
    %c0_12 = arith.constant 0 : index
    %c0_13 = arith.constant 0 : index
    %15 = vector.load %arg6[%c0_12, %c0_13] : memref<32x32xf32, #tpu.memory_space<vmem>>, vector<32x32xf32>
    %c0_14 = arith.constant 0 : index
    %c0_15 = arith.constant 0 : index
    %16 = vector.load %arg7[%c0_14, %c0_15] : memref<1x32xf32, #tpu.memory_space<vmem>>, vector<1x32xf32>
    %cst_16 = arith.constant dense<0.000000e+00> : vector<8x32xf32>
    %17 = tpu.matmul %14, %15, %cst_16 {dimension_numbers = #tpu.dot_dimension_numbers<[1], [0], [0], [1], [0, 0, 1, 1], [], []>} : vector<8x32xf32>, vector<32x32xf32>, vector<8x32xf32> -> vector<8x32xf32>
    %18 = vector.broadcast %16 : vector<1x32xf32> to vector<8x32xf32>
    %19 = arith.addf %17, %18 : vector<8x32xf32>
    %cst_17 = arith.constant 0.000000e+00 : f32
    %20 = vector.broadcast %cst_17 : f32 to vector<8x32xf32>
    %21 = arith.maximumf %19, %20 : vector<8x32xf32>
    %c0_18 = arith.constant 0 : index
    %c0_19 = arith.constant 0 : index
    %22 = vector.load %arg8[%c0_18, %c0_19] : memref<32x128xf32, #tpu.memory_space<vmem>>, vector<32x128xf32>
    %c0_20 = arith.constant 0 : index
    %c0_21 = arith.constant 0 : index
    %23 = vector.load %arg9[%c0_20, %c0_21] : memref<1x128xf32, #tpu.memory_space<vmem>>, vector<1x128xf32>
    %cst_22 = arith.constant dense<0.000000e+00> : vector<8x128xf32>
    %24 = tpu.matmul %21, %22, %cst_22 {dimension_numbers = #tpu.dot_dimension_numbers<[1], [0], [0], [1], [0, 0, 1, 1], [], []>} : vector<8x32xf32>, vector<32x128xf32>, vector<8x128xf32> -> vector<8x128xf32>
    %25 = vector.broadcast %23 : vector<1x128xf32> to vector<8x128xf32>
    %26 = arith.addf %24, %25 : vector<8x128xf32>
    %c0_23 = arith.constant 0 : index
    %c0_24 = arith.constant 0 : index
    %27 = vector.load %arg10[%c0_23, %c0_24] : memref<8x128xf32, #tpu.memory_space<vmem>>, vector<8x128xf32>
    tpu.vector_store %arg10[%c0_23, %c0_24], %26 {strides = array<i32>} : memref<8x128xf32, #tpu.memory_space<vmem>>, vector<8x128xf32>,
    return
  }
  func.func @transform_0(%arg0: i32) -> (i32, i32) {
    %c0_i32 = arith.constant 0 : i32
    %c0_i32_0 = arith.constant 0 : i32
    return %arg0, %c0_i32 : i32, i32
  }
  func.func @transform_1(%arg0: i32) -> (i32, i32) {
    %c0_i32 = arith.constant 0 : i32
    %c0_i32_0 = arith.constant 0 : i32
    %c0_i32_1 = arith.constant 0 : i32
    return %c0_i32, %c0_i32_0 : i32, i32
  }
  func.func @transform_2(%arg0: i32) -> (i32, i32) {
    %c0_i32 = arith.constant 0 : i32
    %c0_i32_0 = arith.constant 0 : i32
    %c0_i32_1 = arith.constant 0 : i32
    return %c0_i32, %c0_i32_0 : i32, i32
  }
  func.func @transform_3(%arg0: i32) -> (i32, i32) {
    %c0_i32 = arith.constant 0 : i32
    %c0_i32_0 = arith.constant 0 : i32
    %c0_i32_1 = arith.constant 0 : i32
    return %c0_i32, %c0_i32_0 : i32, i32
  }
  func.func @transform_4(%arg0: i32) -> (i32, i32) {
    %c0_i32 = arith.constant 0 : i32
    %c0_i32_0 = arith.constant 0 : i32
    %c0_i32_1 = arith.constant 0 : i32
    return %c0_i32, %c0_i32_0 : i32, i32
  }
  func.func @transform_5(%arg0: i32) -> (i32, i32) {
    %c0_i32 = arith.constant 0 : i32
    %c0_i32_0 = arith.constant 0 : i32
    %c0_i32_1 = arith.constant 0 : i32
    return %c0_i32, %c0_i32_0 : i32, i32
  }
  func.func @transform_6(%arg0: i32) -> (i32, i32) {
    %c0_i32 = arith.constant 0 : i32
    %c0_i32_0 = arith.constant 0 : i32
    %c0_i32_1 = arith.constant 0 : i32
    return %c0_i32, %c0_i32_0 : i32, i32
  }
  func.func @transform_7(%arg0: i32) -> (i32, i32) {
    %c0_i32 = arith.constant 0 : i32
    %c0_i32_0 = arith.constant 0 : i32
    %c0_i32_1 = arith.constant 0 : i32
    return %c0_i32, %c0_i32_0 : i32, i32
  }
  func.func @transform_8(%arg0: i32) -> (i32, i32) {
    %c0_i32 = arith.constant 0 : i32
    %c0_i32_0 = arith.constant 0 : i32
    %c0_i32_1 = arith.constant 0 : i32
    return %c0_i32, %c0_i32_0 : i32, i32
  }
  func.func @transform_9(%arg0: i32) -> (i32, i32) {
    %c0_i32 = arith.constant 0 : i32
    %c0_i32_0 = arith.constant 0 : i32
    return %arg0, %c0_i32 : i32, i32
  }
}

</mosaic_0001>

<llo_original>
// kernel: tpu_custom_call.1
$region0: #{tpu_custom_call.1}
  #allocation0 [shape = 'u32[]', space=smem, size = 0x4, offset = 0x4, fixed_abs, tag = 'smem constant byte address 0x4 - core index']
  #allocation1 [shape = 'u32[144,128]{1,0:T(1,128)}', space=vmem, size = 0x12000, scoped, tag = 'internal scratch']
  %s0 = inlined_call_operand.hbm [shape: f32[8,32], index: 0, kind: input, shape index: {}]
  %s1 = inlined_call_operand.hbm [shape: f32[32,32], index: 1, kind: input, shape index: {}]
  %s2 = inlined_call_operand.vmem [shape: f32[1,32], index: 2, kind: input, shape index: {}]
  %s3 = inlined_call_operand.hbm [shape: f32[32,32], index: 3, kind: input, shape index: {}]
  %s4 = inlined_call_operand.vmem [shape: f32[1,32], index: 4, kind: input, shape index: {}]
  %s5 = inlined_call_operand.hbm [shape: f32[32,32], index: 5, kind: input, shape index: {}]
  %s6 = inlined_call_operand.vmem [shape: f32[1,32], index: 6, kind: input, shape index: {}]
  %s7 = inlined_call_operand.hbm [shape: f32[32,128], index: 7, kind: input, shape index: {}]
  %s8 = inlined_call_operand.vmem [shape: f32[1,128], index: 8, kind: input, shape index: {}]
  %s9 = inlined_call_operand.hbm [shape: f32[8,128], index: 9, kind: output, shape index: {}]
  %s10 = sld [smem:[#allocation0]]
  $region66: #{tpu_custom_call.1} parent=0
    _
  %s12 = ssub.s32 1, %s10
  %s13 = scalar_select 0, %s12, %s10
  $region1: #{tpu_custom_call.1} parent=0
    #allocation2 [shape = 'u8[4096]{0}', space=vmem, size = 0x1000, scoped, tag = 'input window, operand 0, single buffered']
    #allocation3 [shape = 's32[1]{0}', space=sflag, size = 0x4, scoped, tag = 'scoped memory for tpu_custom_call.1']
    #allocation4 [shape = 's32[1]{0}', space=sflag, size = 0x4, scoped, tag = 'scoped memory for tpu_custom_call.1']
    #allocation5 [shape = 'u8[16384]{0}', space=vmem, size = 0x4000, scoped, tag = 'input window, operand 1, single buffered']
    #allocation6 [shape = 's32[1]{0}', space=sflag, size = 0x4, scoped, tag = 'scoped memory for tpu_custom_call.1']
    #allocation7 [shape = 'u8[16384]{0}', space=vmem, size = 0x4000, scoped, tag = 'input window, operand 3, single buffered']
    #allocation8 [shape = 'u8[16384]{0}', space=vmem, size = 0x4000, scoped, tag = 'input window, operand 5, single buffered']
    #allocation9 [shape = 's32[1]{0}', space=sflag, size = 0x4, scoped, tag = 'scoped memory for tpu_custom_call.1']
    #allocation10 [shape = 'u8[16384]{0}', space=vmem, size = 0x4000, scoped, tag = 'input window, operand 7, single buffered']
    #allocation11 [shape = 'u8[4096]{0}', space=vmem, size = 0x1000, scoped, tag = 'output window, operand 0, single buffered']
    %14 = vsyncpa [#allocation3], 0
    %15 = vsyncpa [#allocation6], 0
    %16 = vsyncpa [#allocation9], 0
    %17 = vsyncpa [#allocation4], 0
    // Predicated region
    $region2: #{tpu_custom_call.1} parent=1 // pred_check
      _
    $region3: #{tpu_custom_call.1} parent=1 // pred_check_branch
      %19 = sbr.rel (0) target = $region5
    $region4: #{tpu_custom_call.1} parent=1 // pred_region
      %s21 = ssub.s32 128, 128
      %22 = vsyncadd [#allocation3], %s21
      %s24 = sshll.u32 [#allocation2], 4
      %s25 = int_to_ptr.vmem [resolvable:$true] %s24
      %27 = dma.hbm_to_vmem [thread:$0]  %s0, 128, %s25, [#allocation3]
    $region5: #{tpu_custom_call.1} parent=1 // pred_fallthru
      _
    // Predicated region
    $region6: #{tpu_custom_call.1} parent=1 // pred_check
      _
    $region7: #{tpu_custom_call.1} parent=1 // pred_check_branch
      %29 = sbr.rel (0) target = $region9
    $region8: #{tpu_custom_call.1} parent=1 // pred_region
      %s31 = ssub.s32 512, 512
      %32 = vsyncadd [#allocation6], %s31
      %s33 = sshll.u32 [#allocation5], 4
      %s34 = int_to_ptr.vmem [resolvable:$true] %s33
      %39 = dma.hbm_to_vmem [thread:$0]  %s1, 512, %s34, [#allocation6], 128, 128, 8
    $region9: #{tpu_custom_call.1} parent=1 // pred_fallthru
      _
    // Predicated region
    $region10: #{tpu_custom_call.1} parent=1 // pred_check
      _
    $region11: #{tpu_custom_call.1} parent=1 // pred_check_branch
      %41 = sbr.rel (0) target = $region13
    $region12: #{tpu_custom_call.1} parent=1 // pred_region
      _
    $region13: #{tpu_custom_call.1} parent=1 // pred_fallthru
      _
    // Predicated region
    $region14: #{tpu_custom_call.1} parent=1 // pred_check
      _
    $region15: #{tpu_custom_call.1} parent=1 // pred_check_branch
      %43 = sbr.rel (0) target = $region17
    $region16: #{tpu_custom_call.1} parent=1 // pred_region
      %s45 = ssub.s32 512, 512
      %46 = vsyncadd [#allocation6], %s45
      %s47 = sshll.u32 [#allocation7], 4
      %s48 = int_to_ptr.vmem [resolvable:$true] %s47
      %53 = dma.hbm_to_vmem [thread:$0]  %s3, 512, %s48, [#allocation6], 128, 128, 8
    $region17: #{tpu_custom_call.1} parent=1 // pred_fallthru
      _
    // Predicated region
    $region18: #{tpu_custom_call.1} parent=1 // pred_check
      _
    $region19: #{tpu_custom_call.1} parent=1 // pred_check_branch
      %55 = sbr.rel (0) target = $region21
    $region20: #{tpu_custom_call.1} parent=1 // pred_region
      _
    $region21: #{tpu_custom_call.1} parent=1 // pred_fallthru
      _
    // Predicated region
    $region22: #{tpu_custom_call.1} parent=1 // pred_check
      _
    $region23: #{tpu_custom_call.1} parent=1 // pred_check_branch
      %57 = sbr.rel (0) target = $region25
    $region24: #{tpu_custom_call.1} parent=1 // pred_region
      %s59 = ssub.s32 512, 512
      %60 = vsyncadd [#allocation9], %s59
      %s61 = sshll.u32 [#allocation8], 4
      %s62 = int_to_ptr.vmem [resolvable:$true] %s61
      %67 = dma.hbm_to_vmem [thread:$0]  %s5, 512, %s62, [#allocation9], 128, 128, 8
    $region25: #{tpu_custom_call.1} parent=1 // pred_fallthru
      _
    // Predicated region
    $region26: #{tpu_custom_call.1} parent=1 // pred_check
      _
    $region27: #{tpu_custom_call.1} parent=1 // pred_check_branch
      %69 = sbr.rel (0) target = $region29
    $region28: #{tpu_custom_call.1} parent=1 // pred_region
      _
    $region29: #{tpu_custom_call.1} parent=1 // pred_fallthru
      _
    // Predicated region
    $region30: #{tpu_custom_call.1} parent=1 // pred_check
      _
    $region31: #{tpu_custom_call.1} parent=1 // pred_check_branch
      %71 = sbr.rel (0) target = $region33
    $region32: #{tpu_custom_call.1} parent=1 // pred_region
      %s73 = ssub.s32 512, 512
      %74 = vsyncadd [#allocation9], %s73
      %s75 = sshll.u32 [#allocation10], 4
      %s76 = int_to_ptr.vmem [resolvable:$true] %s75
      %81 = dma.hbm_to_vmem [thread:$0]  %s7, 512, %s76, [#allocation9], 128, 128, 8
    $region33: #{tpu_custom_call.1} parent=1 // pred_fallthru
      _
    // Predicated region
    $region34: #{tpu_custom_call.1} parent=1 // pred_check
      _
    $region35: #{tpu_custom_call.1} parent=1 // pred_check_branch
      %83 = sbr.rel (0) target = $region37
    $region36: #{tpu_custom_call.1} parent=1 // pred_region
      _
    $region37: #{tpu_custom_call.1} parent=1 // pred_fallthru
      _
    // Predicated region
    $region38: #{tpu_custom_call.1} parent=1 // pred_check
      _
    $region39: #{tpu_custom_call.1} parent=1 // pred_check_branch
      %85 = sbr.rel (0) target = $region41
    $region40: #{tpu_custom_call.1} parent=1 // pred_region
      %86 = dma.done [#allocation3], 128
    $region41: #{tpu_custom_call.1} parent=1 // pred_fallthru
      _
    // Predicated region
    $region42: #{tpu_custom_call.1} parent=1 // pred_check
      _
    $region43: #{tpu_custom_call.1} parent=1 // pred_check_branch
      %88 = sbr.rel (0) target = $region45
    $region44: #{tpu_custom_call.1} parent=1 // pred_region
      %89 = dma.done [#allocation6], 512
    $region45: #{tpu_custom_call.1} parent=1 // pred_fallthru
      _
    // Predicated region
    $region46: #{tpu_custom_call.1} parent=1 // pred_check
      _
    $region47: #{tpu_custom_call.1} parent=1 // pred_check_branch
      %91 = sbr.rel (0) target = $region49
    $region48: #{tpu_custom_call.1} parent=1 // pred_region
      %92 = dma.done [#allocation6], 512
    $region49: #{tpu_custom_call.1} parent=1 // pred_fallthru
      _
    // Predicated region
    $region50: #{tpu_custom_call.1} parent=1 // pred_check
      _
    $region51: #{tpu_custom_call.1} parent=1 // pred_check_branch
      %94 = sbr.rel (0) target = $region53
    $region52: #{tpu_custom_call.1} parent=1 // pred_region
      %95 = dma.done [#allocation9], 512
    $region53: #{tpu_custom_call.1} parent=1 // pred_fallthru
      _
    // Predicated region
    $region54: #{tpu_custom_call.1} parent=1 // pred_check
      _
    $region55: #{tpu_custom_call.1} parent=1 // pred_check_branch
      %97 = sbr.rel (0) target = $region57
    $region56: #{tpu_custom_call.1} parent=1 // pred_region
      %98 = dma.done [#allocation9], 512
    $region57: #{tpu_custom_call.1} parent=1 // pred_fallthru
      _
    %v99 = vld [vmem:[#allocation2] sm:$0xff]
    %v100 = vld [vmem:[#allocation5] sm:$0xff]
    %v101 = vld [vmem:[#allocation5 + $0x8] sm:$0xff]
    %v102 = vld [vmem:[#allocation5 + $0x10] sm:$0xff]
    %v103 = vld [vmem:[#allocation5 + $0x18] sm:$0xff]
    %v104 = vld [vmem:[%s2] sm:$0x1]
    %v106 = vlaneseq
    %v107 = vshrl.u32 %v106, 7
    %v108 = vsub.s32 0, %v107
    %v109 = vrot.slane %v104, %v108
    %vm111 = vcmask 261120
    %v113 = vsel %vm111, %v99, 0
    %115 = vmatprep.subr.mxu0 0.0
    %116 = vmatpush1.msra.mxu0 0.0
    %117 = vmatprep.subr.mxu0 0.0
    %118 = vmatpush1.msra.mxu0 0.0
    %119 = vmatprep.subr.mxu0 0.0
    %120 = vmatpush1.msra.mxu0 0.0
    %121 = vmatprep.subr.mxu0 0.0
    %122 = vmatpush1.msra.mxu0 0.0
    %123 = vmatprep.subr.mxu0 0.0
    %124 = vmatpush1.msra.mxu0 0.0
    %125 = vmatprep.subr.mxu0 0.0
    %126 = vmatpush1.msra.mxu0 0.0
    %127 = vmatprep.subr.mxu0 0.0
    %128 = vmatpush1.msra.mxu0 0.0
    %129 = vmatprep.subr.mxu0 0.0
    %130 = vmatpush1.msra.mxu0 0.0
    %131 = vmatprep.subr.mxu0 0.0
    %132 = vmatpush1.msra.mxu0 0.0
    %133 = vmatprep.subr.mxu0 0.0
    %134 = vmatpush1.msra.mxu0 0.0
    %135 = vmatprep.subr.mxu0 0.0
    %136 = vmatpush1.msra.mxu0 0.0
    %137 = vmatprep.subr.mxu0 0.0
    %138 = vmatpush1.msra.mxu0 0.0
    %139 = vmatprep.subr.mxu0 0.0
    %140 = vmatpush1.msra.mxu0 %v103
    %141 = vmatprep.subr.mxu0 0.0
    %142 = vmatpush1.msra.mxu0 %v102
    %143 = vmatprep.subr.mxu0 0.0
    %144 = vmatpush1.msra.mxu0 %v101
    %145 = vmatprep.subr.mxu0 0.0
    %146 = vmatpush1.msra.mxu0 %v100
    %147 = vmatprep.subr.mxu0 0.0
    %148 = vmatpush2.msra.mxu0 0.0
    %149 = vmatprep.subr.mxu0 0.0
    %150 = vmatpush2.msra.mxu0 0.0
    %151 = vmatprep.subr.mxu0 0.0
    %152 = vmatpush2.msra.mxu0 0.0
    %153 = vmatprep.subr.mxu0 0.0
    %154 = vmatpush2.msra.mxu0 0.0
    %155 = vmatprep.subr.mxu0 0.0
    %156 = vmatpush2.msra.mxu0 0.0
    %157 = vmatprep.subr.mxu0 0.0
    %158 = vmatpush2.msra.mxu0 0.0
    %159 = vmatprep.subr.mxu0 0.0
    %160 = vmatpush2.msra.mxu0 0.0
    %161 = vmatprep.subr.mxu0 0.0
    %162 = vmatpush2.msra.mxu0 0.0
    %163 = vmatprep.subr.mxu0 0.0
    %164 = vmatpush2.msra.mxu0 0.0
    %165 = vmatprep.subr.mxu0 0.0
    %166 = vmatpush2.msra.mxu0 0.0
    %167 = vmatprep.subr.mxu0 0.0
    %168 = vmatpush2.msra.mxu0 0.0
    %169 = vmatprep.subr.mxu0 0.0
    %170 = vmatpush2.msra.mxu0 0.0
    %171 = vmatprep.subr.mxu0 0.0
    %172 = vmatpush2.msra.mxu0 0.0
    %173 = vmatprep.subr.mxu0 0.0
    %174 = vmatpush2.msra.mxu0 0.0
    %175 = vmatprep.subr.mxu0 0.0
    %176 = vmatpush2.msra.mxu0 0.0
    %177 = vmatprep.subr.mxu0 0.0
    %178 = vmatpush2.msra.mxu0 0.0
    %179 = vmatprep.mubr.f32.mxu0 0.0
    %180 = vmatmul.mubr.f32.gmra.mxu0 %v113
    %v181 = vpop.f32.mrf.mxu0
    %v182 = vadd.f32 %v109, %v181
    %v183 = vpop.f32.mrf.mxu0
    %184 = vdwg.mxu0
    %v185 = vmax.f32 %v182, 0.0
    %v186 = vld [vmem:[#allocation7] sm:$0xff]
    %v187 = vld [vmem:[#allocation7 + $0x8] sm:$0xff]
    %v188 = vld [vmem:[#allocation7 + $0x10] sm:$0xff]
    %v189 = vld [vmem:[#allocation7 + $0x18] sm:$0xff]
    %v190 = vld [vmem:[%s4] sm:$0x1]
    %v192 = vlaneseq
    %v193 = vshrl.u32 %v192, 7
    %v194 = vsub.s32 0, %v193
    %v195 = vrot.slane %v190, %v194
    %v198 = vsel %vm111, %v185, 0
    %200 = vmatprep.subr.mxu0 0.0
    %201 = vmatpush1.msra.mxu0 0.0
    %202 = vmatprep.subr.mxu0 0.0
    %203 = vmatpush1.msra.mxu0 0.0
    %204 = vmatprep.subr.mxu0 0.0
    %205 = vmatpush1.msra.mxu0 0.0
    %206 = vmatprep.subr.mxu0 0.0
    %207 = vmatpush1.msra.mxu0 0.0
    %208 = vmatprep.subr.mxu0 0.0
    %209 = vmatpush1.msra.mxu0 0.0
    %210 = vmatprep.subr.mxu0 0.0
    %211 = vmatpush1.msra.mxu0 0.0
    %212 = vmatprep.subr.mxu0 0.0
    %213 = vmatpush1.msra.mxu0 0.0
    %214 = vmatprep.subr.mxu0 0.0
    %215 = vmatpush1.msra.mxu0 0.0
    %216 = vmatprep.subr.mxu0 0.0
    %217 = vmatpush1.msra.mxu0 0.0
    %218 = vmatprep.subr.mxu0 0.0
    %219 = vmatpush1.msra.mxu0 0.0
    %220 = vmatprep.subr.mxu0 0.0
    %221 = vmatpush1.msra.mxu0 0.0
    %222 = vmatprep.subr.mxu0 0.0
    %223 = vmatpush1.msra.mxu0 0.0
    %224 = vmatprep.subr.mxu0 0.0
    %225 = vmatpush1.msra.mxu0 %v189
    %226 = vmatprep.subr.mxu0 0.0
    %227 = vmatpush1.msra.mxu0 %v188
    %228 = vmatprep.subr.mxu0 0.0
    %229 = vmatpush1.msra.mxu0 %v187
    %230 = vmatprep.subr.mxu0 0.0
    %231 = vmatpush1.msra.mxu0 %v186
    %232 = vmatprep.subr.mxu0 0.0
    %233 = vmatpush2.msra.mxu0 0.0
    %234 = vmatprep.subr.mxu0 0.0
    %235 = vmatpush2.msra.mxu0 0.0
    %236 = vmatprep.subr.mxu0 0.0
    %237 = vmatpush2.msra.mxu0 0.0
    %238 = vmatprep.subr.mxu0 0.0
    %239 = vmatpush2.msra.mxu0 0.0
    %240 = vmatprep.subr.mxu0 0.0
    %241 = vmatpush2.msra.mxu0 0.0
    %242 = vmatprep.subr.mxu0 0.0
    %243 = vmatpush2.msra.mxu0 0.0
    %244 = vmatprep.subr.mxu0 0.0
    %245 = vmatpush2.msra.mxu0 0.0
    %246 = vmatprep.subr.mxu0 0.0
    %247 = vmatpush2.msra.mxu0 0.0
    %248 = vmatprep.subr.mxu0 0.0
    %249 = vmatpush2.msra.mxu0 0.0
    %250 = vmatprep.subr.mxu0 0.0
    %251 = vmatpush2.msra.mxu0 0.0
    %252 = vmatprep.subr.mxu0 0.0
    %253 = vmatpush2.msra.mxu0 0.0
    %254 = vmatprep.subr.mxu0 0.0
    %255 = vmatpush2.msra.mxu0 0.0
    %256 = vmatprep.subr.mxu0 0.0
    %257 = vmatpush2.msra.mxu0 0.0
    %258 = vmatprep.subr.mxu0 0.0
    %259 = vmatpush2.msra.mxu0 0.0
    %260 = vmatprep.subr.mxu0 0.0
    %261 = vmatpush2.msra.mxu0 0.0
    %262 = vmatprep.subr.mxu0 0.0
    %263 = vmatpush2.msra.mxu0 0.0
    %264 = vmatprep.mubr.f32.mxu0 0.0
    %265 = vmatmul.mubr.f32.gmra.mxu0 %v198
    %v266 = vpop.f32.mrf.mxu0
    %v267 = vadd.f32 %v195, %v266
    %v268 = vpop.f32.mrf.mxu0
    %269 = vdwg.mxu0
    %v270 = vmax.f32 %v267, 0.0
    %v271 = vld [vmem:[#allocation8] sm:$0xff]
    %v272 = vld [vmem:[#allocation8 + $0x8] sm:$0xff]
    %v273 = vld [vmem:[#allocation8 + $0x10] sm:$0xff]
    %v274 = vld [vmem:[#allocation8 + $0x18] sm:$0xff]
    %v275 = vld [vmem:[%s6] sm:$0x1]
    %v277 = vlaneseq
    %v278 = vshrl.u32 %v277, 7
    %v279 = vsub.s32 0, %v278
    %v280 = vrot.slane %v275, %v279
    %v283 = vsel %vm111, %v270, 0
    %285 = vmatprep.subr.mxu0 0.0
    %286 = vmatpush1.msra.mxu0 0.0
    %287 = vmatprep.subr.mxu0 0.0
    %288 = vmatpush1.msra.mxu0 0.0
    %289 = vmatprep.subr.mxu0 0.0
    %290 = vmatpush1.msra.mxu0 0.0
    %291 = vmatprep.subr.mxu0 0.0
    %292 = vmatpush1.msra.mxu0 0.0
    %293 = vmatprep.subr.mxu0 0.0
    %294 = vmatpush1.msra.mxu0 0.0
    %295 = vmatprep.subr.mxu0 0.0
    %296 = vmatpush1.msra.mxu0 0.0
    %297 = vmatprep.subr.mxu0 0.0
    %298 = vmatpush1.msra.mxu0 0.0
    %299 = vmatprep.subr.mxu0 0.0
    %300 = vmatpush1.msra.mxu0 0.0
    %301 = vmatprep.subr.mxu0 0.0
    %302 = vmatpush1.msra.mxu0 0.0
    %303 = vmatprep.subr.mxu0 0.0
    %304 = vmatpush1.msra.mxu0 0.0
    %305 = vmatprep.subr.mxu0 0.0
    %306 = vmatpush1.msra.mxu0 0.0
    %307 = vmatprep.subr.mxu0 0.0
    %308 = vmatpush1.msra.mxu0 0.0
    %309 = vmatprep.subr.mxu0 0.0
    %310 = vmatpush1.msra.mxu0 %v274
    %311 = vmatprep.subr.mxu0 0.0
    %312 = vmatpush1.msra.mxu0 %v273
    %313 = vmatprep.subr.mxu0 0.0
    %314 = vmatpush1.msra.mxu0 %v272
    %315 = vmatprep.subr.mxu0 0.0
    %316 = vmatpush1.msra.mxu0 %v271
    %317 = vmatprep.subr.mxu0 0.0
    %318 = vmatpush2.msra.mxu0 0.0
    %319 = vmatprep.subr.mxu0 0.0
    %320 = vmatpush2.msra.mxu0 0.0
    %321 = vmatprep.subr.mxu0 0.0
    %322 = vmatpush2.msra.mxu0 0.0
    %323 = vmatprep.subr.mxu0 0.0
    %324 = vmatpush2.msra.mxu0 0.0
    %325 = vmatprep.subr.mxu0 0.0
    %326 = vmatpush2.msra.mxu0 0.0
    %327 = vmatprep.subr.mxu0 0.0
    %328 = vmatpush2.msra.mxu0 0.0
    %329 = vmatprep.subr.mxu0 0.0
    %330 = vmatpush2.msra.mxu0 0.0
    %331 = vmatprep.subr.mxu0 0.0
    %332 = vmatpush2.msra.mxu0 0.0
    %333 = vmatprep.subr.mxu0 0.0
    %334 = vmatpush2.msra.mxu0 0.0
    %335 = vmatprep.subr.mxu0 0.0
    %336 = vmatpush2.msra.mxu0 0.0
    %337 = vmatprep.subr.mxu0 0.0
    %338 = vmatpush2.msra.mxu0 0.0
    %339 = vmatprep.subr.mxu0 0.0
    %340 = vmatpush2.msra.mxu0 0.0
    %341 = vmatprep.subr.mxu0 0.0
    %342 = vmatpush2.msra.mxu0 0.0
    %343 = vmatprep.subr.mxu0 0.0
    %344 = vmatpush2.msra.mxu0 0.0
    %345 = vmatprep.subr.mxu0 0.0
    %346 = vmatpush2.msra.mxu0 0.0
    %347 = vmatprep.subr.mxu0 0.0
    %348 = vmatpush2.msra.mxu0 0.0
    %349 = vmatprep.mubr.f32.mxu0 0.0
    %350 = vmatmul.mubr.f32.gmra.mxu0 %v283
    %v351 = vpop.f32.mrf.mxu0
    %v352 = vadd.f32 %v280, %v351
    %v353 = vpop.f32.mrf.mxu0
    %354 = vdwg.mxu0
    %v355 = vmax.f32 %v352, 0.0
    %v356 = vld [vmem:[#allocation10] sm:$0xff]
    %v357 = vld [vmem:[#allocation10 + $0x8] sm:$0xff]
    %v358 = vld [vmem:[#allocation10 + $0x10] sm:$0xff]
    %v359 = vld [vmem:[#allocation10 + $0x18] sm:$0xff]
    %v360 = vld [vmem:[%s8] sm:$0x1]
    %v362 = vlaneseq
    %v363 = vshrl.u32 %v362, 7
    %v364 = vsub.s32 0, %v363
    %v365 = vrot.slane %v360, %v364
    %v368 = vsel %vm111, %v355, 0
    %370 = vmatprep.subr.mxu0 0.0
    %371 = vmatpush1.msra.mxu0 0.0
    %372 = vmatprep.subr.mxu0 0.0
    %373 = vmatpush1.msra.mxu0 0.0
    %374 = vmatprep.subr.mxu0 0.0
    %375 = vmatpush1.msra.mxu0 0.0
    %376 = vmatprep.subr.mxu0 0.0
    %377 = vmatpush1.msra.mxu0 0.0
    %378 = vmatprep.subr.mxu0 0.0
    %379 = vmatpush1.msra.mxu0 0.0
    %380 = vmatprep.subr.mxu0 0.0
    %381 = vmatpush1.msra.mxu0 0.0
    %382 = vmatprep.subr.mxu0 0.0
    %383 = vmatpush1.msra.mxu0 0.0
    %384 = vmatprep.subr.mxu0 0.0
    %385 = vmatpush1.msra.mxu0 0.0
    %386 = vmatprep.subr.mxu0 0.0
    %387 = vmatpush1.msra.mxu0 0.0
    %388 = vmatprep.subr.mxu0 0.0
    %389 = vmatpush1.msra.mxu0 0.0
    %390 = vmatprep.subr.mxu0 0.0
    %391 = vmatpush1.msra.mxu0 0.0
    %392 = vmatprep.subr.mxu0 0.0
    %393 = vmatpush1.msra.mxu0 0.0
    %394 = vmatprep.subr.mxu0 0.0
    %395 = vmatpush1.msra.mxu0 %v359
    %396 = vmatprep.subr.mxu0 0.0
    %397 = vmatpush1.msra.mxu0 %v358
    %398 = vmatprep.subr.mxu0 0.0
    %399 = vmatpush1.msra.mxu0 %v357
    %400 = vmatprep.subr.mxu0 0.0
    %401 = vmatpush1.msra.mxu0 %v356
    %402 = vmatprep.subr.mxu0 0.0
    %403 = vmatpush2.msra.mxu0 0.0
    %404 = vmatprep.subr.mxu0 0.0
    %405 = vmatpush2.msra.mxu0 0.0
    %406 = vmatprep.subr.mxu0 0.0
    %407 = vmatpush2.msra.mxu0 0.0
    %408 = vmatprep.subr.mxu0 0.0
    %409 = vmatpush2.msra.mxu0 0.0
    %410 = vmatprep.subr.mxu0 0.0
    %411 = vmatpush2.msra.mxu0 0.0
    %412 = vmatprep.subr.mxu0 0.0
    %413 = vmatpush2.msra.mxu0 0.0
    %414 = vmatprep.subr.mxu0 0.0
    %415 = vmatpush2.msra.mxu0 0.0
    %416 = vmatprep.subr.mxu0 0.0
    %417 = vmatpush2.msra.mxu0 0.0
    %418 = vmatprep.subr.mxu0 0.0
    %419 = vmatpush2.msra.mxu0 0.0
    %420 = vmatprep.subr.mxu0 0.0
    %421 = vmatpush2.msra.mxu0 0.0
    %422 = vmatprep.subr.mxu0 0.0
    %423 = vmatpush2.msra.mxu0 0.0
    %424 = vmatprep.subr.mxu0 0.0
    %425 = vmatpush2.msra.mxu0 0.0
    %426 = vmatprep.subr.mxu0 0.0
    %427 = vmatpush2.msra.mxu0 0.0
    %428 = vmatprep.subr.mxu0 0.0
    %429 = vmatpush2.msra.mxu0 0.0
    %430 = vmatprep.subr.mxu0 0.0
    %431 = vmatpush2.msra.mxu0 0.0
    %432 = vmatprep.subr.mxu0 0.0
    %433 = vmatpush2.msra.mxu0 0.0
    %434 = vmatprep.mubr.f32.mxu0 0.0
    %435 = vmatmul.mubr.f32.gmra.mxu0 %v368
    %v436 = vpop.f32.mrf.mxu0
    %v437 = vadd.f32 %v365, %v436
    %v438 = vpop.f32.mrf.mxu0
    %439 = vdwg.mxu0
    %440 = vst [vmem:[#allocation11] sm:$0xff] %v437
    // Predicated region
    $region58: #{tpu_custom_call.1} parent=1 // pred_check
      _
    $region59: #{tpu_custom_call.1} parent=1 // pred_check_branch
      %442 = sbr.rel (0) target = $region61
    $region60: #{tpu_custom_call.1} parent=1 // pred_region
      %s444 = ssub.s32 128, 128
      %445 = vsyncadd [#allocation4], %s444
      %s447 = sshll.u32 [#allocation11], 4
      %s448 = int_to_ptr.vmem [resolvable:$true] %s447
      %450 = dma.vmem_to_hbm [thread:$0]  %s448, 128, %s9, [#allocation4]
    $region61: #{tpu_custom_call.1} parent=1 // pred_fallthru
      _
    // Predicated region
    $region62: #{tpu_custom_call.1} parent=1 // pred_check
      _
    $region63: #{tpu_custom_call.1} parent=1 // pred_check_branch
      %452 = sbr.rel (0) target = $region65
    $region64: #{tpu_custom_call.1} parent=1 // pred_region
      %453 = dma.done [#allocation4], 128
    $region65: #{tpu_custom_call.1} parent=1 // pred_fallthru
      _
    %454 = vsyncpa [#allocation3], 1
    %455 = vsyncpa [#allocation6], 1
    %456 = vsyncpa [#allocation9], 1
    %457 = vsyncpa [#allocation4], 1

</llo_original>
